<compile_context>
chip_gen: v6e
topology: v6e:2x2x1
jax: 0.10.0
libtpu: 0.0.40
codegen_flags: <defaults>
</compile_context>

<pallas_src>
import functools

import jax
import jax.numpy as jnp
from jax.experimental import pallas as pl
from jax.experimental.pallas import tpu as pltpu

_LANE = 128
_SUBLANE = 8


def _round_up(v, m):
    return (v + m - 1) // m * m


def _label_smooth_ce_kernel(x_ref, t_ref, loss_ref,
                            m_ref, s_ref, sumx_ref, xt_ref,
                            *, smoothing, num_classes, block_cols, cols_masked):
    """One (row-tile, class-tile) grid step.

    Row-resident scratch carries an online logsumexp (m, s), the running sum of
    raw logits (smoothing term) and the running target logit across the class
    (reduction) grid axis.  The per-row loss is written once, at the last class tile.
    """
    k = pl.program_id(1)
    n_k = pl.num_programs(1)

    @pl.when(k == 0)
    def _init():
        m_ref[...] = jnp.full_like(m_ref, -jnp.inf)
        s_ref[...] = jnp.zeros_like(s_ref)
        sumx_ref[...] = jnp.zeros_like(sumx_ref)
        xt_ref[...] = jnp.zeros_like(xt_ref)

    def accumulate(mask_cols):
        x = x_ref[...]                                        # (TN, TC), native dtype
        # Local class ids (1, TC); target / class count rebased per tile so no
        # per-element "+ k*TC" is needed in the hot loop.
        col = jax.lax.broadcasted_iota(jnp.int32, (1, block_cols), 1)
        t_rel = t_ref[...] - k * block_cols                   # (TN, 1) int32

        if mask_cols:
            # Out-of-bounds columns (only possible on the last class tile) hold
            # garbage; exclude them from the lse and the sum(x) accumulation.
            valid = col < (num_classes - k * block_cols)      # (1, TC)
            x_lse = jnp.where(valid, x, -jnp.inf)
            x_sum = jnp.where(valid, x, 0)
        else:
            x_lse = x
            x_sum = x

        ones = jnp.ones((block_cols, 1), jnp.float32)

        # Online logsumexp across class tiles; sum(exp) offloaded to the MXU.
        m_old = m_ref[...]
        m_new = jnp.maximum(
            m_old, jnp.max(x_lse, axis=-1, keepdims=True).astype(jnp.float32))
        p = jnp.exp(x_lse - m_new)                            # f32 via promotion
        s_ref[...] = s_ref[...] * jnp.exp(m_old - m_new) + jnp.dot(
            p, ones, precision=jax.lax.Precision.HIGHEST,
            preferred_element_type=jnp.float32)
        m_ref[...] = m_new

        # Running sum of logits (smoothing mean), also on the MXU (bf16 inputs
        # go straight in; accumulation is f32).
        sumx_ref[...] += jnp.dot(
            x_sum, jnp.ones((block_cols, 1), x_sum.dtype),
            precision=jax.lax.Precision.HIGHEST,
            preferred_element_type=jnp.float32)

        # Target logit via compare+select.  At most one column matches per row,
        # so the native-dtype sum is exact; only the (TN, 1) result is upcast.
        xt_ref[...] += jnp.sum(jnp.where(col == t_rel, x, 0),
                               axis=-1, keepdims=True).astype(jnp.float32)

    if cols_masked:
        @pl.when(k < n_k - 1)
        def _acc_inner():
            accumulate(False)

        @pl.when(k == n_k - 1)
        def _acc_last():
            accumulate(True)
    else:
        accumulate(False)

    @pl.when(k == n_k - 1)
    def _finalize():
        confidence = 1.0 - smoothing
        lse = m_ref[...] + jnp.log(s_ref[...])                # (TN, 1)
        loss_ref[...] = (lse
                         - confidence * xt_ref[...]
                         - (smoothing / num_classes) * sumx_ref[...])


def label_smooth_cross_entropy(x, targets, smoothing: float = 0.1,
                               block_rows: int = 128,
                               tile_bytes: int = 4 * 1024 * 1024):
    """Label-smoothed cross entropy (mean over batch) of (N, C) logits.

    `x` may be f32 or bf16 (feed bf16 from the producer on bandwidth-starved
    chips); all reductions run in f32.  `tile_bytes` is the per-pipeline-buffer
    budget: the default 4 MiB keeps the total VMEM footprint v7x-safe; raise to
    8-16 MiB only for very large C on v6e.
    """
    assert smoothing < 1
    n, c = x.shape
    itemsize = jnp.dtype(x.dtype).itemsize

    # Row tile: multiple of 8 sublanes, capped at block_rows.  Guarantee >= 2 row
    # tiles when possible so the "parallel" row axis spans both v7x TensorCores.
    tn = min(_round_up(n, _SUBLANE), block_rows)
    if n > _SUBLANE and pl.cdiv(n, tn) < 2:
        tn = _round_up(pl.cdiv(n, 2), _SUBLANE)

    # Class tile: the whole class axis if one (tn, C) slab fits the budget, else a
    # lane-aligned tile reduced online across a second ("arbitrary") grid axis.
    if tn * c * itemsize <= tile_bytes:
        tc = c
    else:
        tc = max(_LANE, (tile_bytes // (tn * itemsize)) // _LANE * _LANE)
        tc = min(tc, c)

    grid = (pl.cdiv(n, tn), pl.cdiv(c, tc))
    cols_masked = (c % tc) != 0

    # Explicit VMEM budget: 2x double-buffered logits tile + f32 temporaries
    # (exp/mask copies) + headroom.  With the default tile this stays far below
    # v7x's 64 MiB physical VMEM.
    tile_b = tn * tc * itemsize
    f32_b = tn * tc * 4
    vmem_limit = int(min(96 * 1024 * 1024,
                         max(32 * 1024 * 1024, 2 * tile_b + 4 * f32_b + (2 << 20))))

    t2d = targets.astype(jnp.int32).reshape(n, 1)

    kernel = functools.partial(
        _label_smooth_ce_kernel,
        smoothing=float(smoothing),
        num_classes=c,
        block_cols=tc,
        cols_masked=cols_masked,
    )

    per_row = pl.pallas_call(
        kernel,
        grid=grid,
        in_specs=[
            pl.BlockSpec((tn, tc), lambda i, k: (i, k)),      # logits tile (streamed)
            pl.BlockSpec((tn, 1), lambda i, k: (i, 0)),       # targets (row-resident)
        ],
        out_specs=pl.BlockSpec((tn, 1), lambda i, k: (i, 0)),  # per-row loss
        out_shape=jax.ShapeDtypeStruct((n, 1), jnp.float32),
        scratch_shapes=[pltpu.VMEM((tn, 1), jnp.float32)] * 4,  # m, s, sum(x), x_t
        compiler_params=pltpu.CompilerParams(
            dimension_semantics=("parallel", "arbitrary"),
            vmem_limit_bytes=vmem_limit),
    )(x, t2d)

    # Tiny final reduction in plain XLA; per-row partials keep the row-tile axis
    # megacore-parallel.
    return jnp.sum(per_row) / n


def _reference(x, targets, smoothing=0.1):
    confidence = 1.0 - smoothing
    logp = jax.nn.log_softmax(x.astype(jnp.float32), axis=-1)
    nll = -jnp.take_along_axis(logp, targets[:, None].astype(jnp.int32), axis=-1)[:, 0]
    smooth = -jnp.mean(logp, axis=-1)
    return jnp.mean(confidence * nll + smoothing * smooth)


if __name__ == "__main__":
    key = jax.random.PRNGKey(0)
    kx, kt, kx2, kt2 = jax.random.split(key, 4)

    # Case 1: small batch, single class tile (matches the module's typical use).
    N, C = 8, 16
    x = jax.random.normal(kx, (N, C), dtype=jnp.float32)
    targets = jax.random.randint(kt, (N,), 0, C, dtype=jnp.int32)

    loss = label_smooth_cross_entropy(x, targets, smoothing=0.1)
    loss = jax.block_until_ready(loss)
    ref = _reference(x, targets, smoothing=0.1)
    assert jnp.allclose(loss, ref, atol=1e-5, rtol=1e-5), (loss, ref)

    # Case 2: force the tiled path via a tiny per-buffer budget: non-aligned rows
    # (partial row blocks, no padding), >= 2 row tiles, class tiling with online
    # logsumexp and a masked partial last class tile.
    N2, C2 = 13, 200
    x2 = jax.random.normal(kx2, (N2, C2), dtype=jnp.float32)
    targets2 = jax.random.randint(kt2, (N2,), 0, C2, dtype=jnp.int32)

    loss2 = label_smooth_cross_entropy(x2, targets2, smoothing=0.1, tile_bytes=4096)
    loss2 = jax.block_until_ready(loss2)
    ref2 = _reference(x2, targets2, smoothing=0.1)
    assert jnp.allclose(loss2, ref2, atol=1e-5, rtol=1e-5), (loss2, ref2)

    print("KERNEL_OK")
</pallas_src>

<mosaic_0001>
module attributes {stable_mosaic.version = 11 : i64} {
  func.func @_label_smooth_ce_kernel(%arg0: i32, %arg1: i32, %arg2: memref<8x16xf32, #tpu.memory_space<vmem>>, %arg3: memref<8x1xi32, #tpu.memory_space<vmem>>, %arg4: memref<8x1xf32, #tpu.memory_space<vmem>>, %arg5: memref<8x1xf32, #tpu.memory_space<vmem>>, %arg6: memref<8x1xf32, #tpu.memory_space<vmem>>, %arg7: memref<8x1xf32, #tpu.memory_space<vmem>>, %arg8: memref<8x1xf32, #tpu.memory_space<vmem>>) attributes {dimension_semantics = [#tpu.dimension_semantics<parallel>, #tpu.dimension_semantics<arbitrary>], iteration_bounds = array<i64: 1, 1>, scalar_prefetch = 0 : i64, scratch_operands = 4 : i64, tpu.core_type = #tpu.core_type<tc>, window_params = [{transform_indices = @transform_0, window_bounds = array<i64: 8, 16>}, {transform_indices = @transform_1, window_bounds = array<i64: 8, 1>}, {transform_indices = @transform_2, window_bounds = array<i64: 8, 1>}]} {
    %c0_i32 = arith.constant 0 : i32
    %0 = arith.cmpi eq, %arg1, %c0_i32 : i32
    %1 = arith.extui %0 : i1 to i32
    %c0_i32_0 = arith.constant 0 : i32
    %2 = arith.cmpi ne, %1, %c0_i32_0 : i32
    scf.if %2 {
      %cst_28 = arith.constant 0xFF800000 : f32
      %44 = vector.broadcast %cst_28 : f32 to vector<8x1xf32>
      %c0_29 = arith.constant 0 : index
      %c0_30 = arith.constant 0 : index
      %45 = vector.load %arg5[%c0_29, %c0_30] : memref<8x1xf32, #tpu.memory_space<vmem>>, vector<8x1xf32>
      tpu.vector_store %arg5[%c0_29, %c0_30], %44 {strides = array<i32>} : memref<8x1xf32, #tpu.memory_space<vmem>>, vector<8x1xf32>,
      %cst_31 = arith.constant 0.000000e+00 : f32
      %46 = vector.broadcast %cst_31 : f32 to vector<8x1xf32>
      %c0_32 = arith.constant 0 : index
      %c0_33 = arith.constant 0 : index
      %47 = vector.load %arg6[%c0_32, %c0_33] : memref<8x1xf32, #tpu.memory_space<vmem>>, vector<8x1xf32>
      tpu.vector_store %arg6[%c0_32, %c0_33], %46 {strides = array<i32>} : memref<8x1xf32, #tpu.memory_space<vmem>>, vector<8x1xf32>,
      %cst_34 = arith.constant 0.000000e+00 : f32
      %48 = vector.broadcast %cst_34 : f32 to vector<8x1xf32>
      %c0_35 = arith.constant 0 : index
      %c0_36 = arith.constant 0 : index
      %49 = vector.load %arg7[%c0_35, %c0_36] : memref<8x1xf32, #tpu.memory_space<vmem>>, vector<8x1xf32>
      tpu.vector_store %arg7[%c0_35, %c0_36], %48 {strides = array<i32>} : memref<8x1xf32, #tpu.memory_space<vmem>>, vector<8x1xf32>,
      %cst_37 = arith.constant 0.000000e+00 : f32
      %50 = vector.broadcast %cst_37 : f32 to vector<8x1xf32>
      %c0_38 = arith.constant 0 : index
      %c0_39 = arith.constant 0 : index
      %51 = vector.load %arg8[%c0_38, %c0_39] : memref<8x1xf32, #tpu.memory_space<vmem>>, vector<8x1xf32>
      tpu.vector_store %arg8[%c0_38, %c0_39], %50 {strides = array<i32>} : memref<8x1xf32, #tpu.memory_space<vmem>>, vector<8x1xf32>,
    } else {
    }
    %c0 = arith.constant 0 : index
    %c0_1 = arith.constant 0 : index
    %3 = vector.load %arg2[%c0, %c0_1] : memref<8x16xf32, #tpu.memory_space<vmem>>, vector<8x16xf32>
    %4 = tpu.iota {dimensions = array<i32: 1>} : vector<1x16xi32>
    %c0_2 = arith.constant 0 : index
    %c0_3 = arith.constant 0 : index
    %5 = vector.load %arg3[%c0_2, %c0_3] : memref<8x1xi32, #tpu.memory_space<vmem>>, vector<8x1xi32>
    %c16_i32 = arith.constant 16 : i32
    %6 = arith.muli %arg1, %c16_i32 : i32
    %7 = vector.broadcast %6 : i32 to vector<8x1xi32>
    %8 = arith.subi %5, %7 : vector<8x1xi32>
    %cst = arith.constant 1.000000e+00 : f32
    %9 = vector.broadcast %cst : f32 to vector<16x1xf32>
    %c0_4 = arith.constant 0 : index
    %c0_5 = arith.constant 0 : index
    %10 = vector.load %arg5[%c0_4, %c0_5] : memref<8x1xf32, #tpu.memory_space<vmem>>, vector<8x1xf32>
    %cst_6 = arith.constant dense<0xFF800000> : vector<8xf32>
    %11 = vector.multi_reduction <maximumf>, %3, %cst_6 [1] : vector<8x16xf32> to vector<8xf32>
    %12 = vector.shape_cast %11 : vector<8xf32> to vector<8x1xf32>
    %13 = arith.maximumf %10, %12 : vector<8x1xf32>
    %14 = vector.broadcast %13 : vector<8x1xf32> to vector<8x16xf32>
    %15 = arith.subf %3, %14 : vector<8x16xf32>
    %16 = math.exp %15 : vector<8x16xf32>
    %c0_7 = arith.constant 0 : index
    %c0_8 = arith.constant 0 : index
    %17 = vector.load %arg6[%c0_7, %c0_8] : memref<8x1xf32, #tpu.memory_space<vmem>>, vector<8x1xf32>
    %18 = arith.subf %10, %13 : vector<8x1xf32>
    %19 = math.exp %18 : vector<8x1xf32>
    %20 = arith.mulf %17, %19 : vector<8x1xf32>
    %cst_9 = arith.constant dense<0.000000e+00> : vector<8x1xf32>
    %21 = tpu.matmul %16, %9, %cst_9 {dimension_numbers = #tpu.dot_dimension_numbers<[1], [0], [0], [1], [0, 0, 1, 1], [], []>, precision = #tpu.contract_precision<fp32>} : vector<8x16xf32>, vector<16x1xf32>, vector<8x1xf32> -> vector<8x1xf32>
    %22 = arith.addf %20, %21 : vector<8x1xf32>
    %c0_10 = arith.constant 0 : index
    %c0_11 = arith.constant 0 : index
    %23 = vector.load %arg6[%c0_10, %c0_11] : memref<8x1xf32, #tpu.memory_space<vmem>>, vector<8x1xf32>
    tpu.vector_store %arg6[%c0_10, %c0_11], %22 {strides = array<i32>} : memref<8x1xf32, #tpu.memory_space<vmem>>, vector<8x1xf32>,
    %c0_12 = arith.constant 0 : index
    %c0_13 = arith.constant 0 : index
    %24 = vector.load %arg5[%c0_12, %c0_13] : memref<8x1xf32, #tpu.memory_space<vmem>>, vector<8x1xf32>
    tpu.vector_store %arg5[%c0_12, %c0_13], %13 {strides = array<i32>} : memref<8x1xf32, #tpu.memory_space<vmem>>, vector<8x1xf32>,
    %c0_14 = arith.constant 0 : index
    %c0_15 = arith.constant 0 : index
    %25 = vector.load %arg7[%c0_14, %c0_15] : memref<8x1xf32, #tpu.memory_space<vmem>>, vector<8x1xf32>
    %cst_16 = arith.constant 1.000000e+00 : f32
    %26 = vector.broadcast %cst_16 : f32 to vector<16x1xf32>
    %cst_17 = arith.constant dense<0.000000e+00> : vector<8x1xf32>
    %27 = tpu.matmul %3, %26, %cst_17 {dimension_numbers = #tpu.dot_dimension_numbers<[1], [0], [0], [1], [0, 0, 1, 1], [], []>, precision = #tpu.contract_precision<fp32>} : vector<8x16xf32>, vector<16x1xf32>, vector<8x1xf32> -> vector<8x1xf32>
    %28 = arith.addf %25, %27 : vector<8x1xf32>
    %c0_18 = arith.constant 0 : index
    %c0_19 = arith.constant 0 : index
    %29 = vector.load %arg7[%c0_18, %c0_19] : memref<8x1xf32, #tpu.memory_space<vmem>>, vector<8x1xf32>
    tpu.vector_store %arg7[%c0_18, %c0_19], %28 {strides = array<i32>} : memref<8x1xf32, #tpu.memory_space<vmem>>, vector<8x1xf32>,
    %c0_20 = arith.constant 0 : index
    %c0_21 = arith.constant 0 : index
    %30 = vector.load %arg8[%c0_20, %c0_21] : memref<8x1xf32, #tpu.memory_space<vmem>>, vector<8x1xf32>
    %31 = vector.broadcast %4 : vector<1x16xi32> to vector<8x16xi32>
    %32 = vector.broadcast %8 : vector<8x1xi32> to vector<8x16xi32>
    %33 = arith.cmpi eq, %31, %32 : vector<8x16xi32>
    %c0_i32_22 = arith.constant 0 : i32
    %34 = arith.sitofp %c0_i32_22 : i32 to f32
    %35 = vector.broadcast %34 : f32 to vector<8x16xf32>
    %36 = arith.select %33, %3, %35 : vector<8x16xi1>, vector<8x16xf32>
    %cst_23 = arith.constant dense<0.000000e+00> : vector<8xf32>
    %37 = vector.multi_reduction <add>, %36, %cst_23 [1] : vector<8x16xf32> to vector<8xf32>
    %38 = vector.shape_cast %37 : vector<8xf32> to vector<8x1xf32>
    %39 = arith.addf %30, %38 : vector<8x1xf32>
    %c0_24 = arith.constant 0 : index
    %c0_25 = arith.constant 0 : index
    %40 = vector.load %arg8[%c0_24, %c0_25] : memref<8x1xf32, #tpu.memory_space<vmem>>, vector<8x1xf32>
    tpu.vector_store %arg8[%c0_24, %c0_25], %39 {strides = array<i32>} : memref<8x1xf32, #tpu.memory_space<vmem>>, vector<8x1xf32>,
    %c0_i32_26 = arith.constant 0 : i32
    %41 = arith.cmpi eq, %arg1, %c0_i32_26 : i32
    %42 = arith.extui %41 : i1 to i32
    %c0_i32_27 = arith.constant 0 : i32
    %43 = arith.cmpi ne, %42, %c0_i32_27 : i32
    scf.if %43 {
      %c0_28 = arith.constant 0 : index
      %c0_29 = arith.constant 0 : index
      %44 = vector.load %arg5[%c0_28, %c0_29] : memref<8x1xf32, #tpu.memory_space<vmem>>, vector<8x1xf32>
      %c0_30 = arith.constant 0 : index
      %c0_31 = arith.constant 0 : index
      %45 = vector.load %arg6[%c0_30, %c0_31] : memref<8x1xf32, #tpu.memory_space<vmem>>, vector<8x1xf32>
      %46 = math.log %45 : vector<8x1xf32>
      %47 = arith.addf %44, %46 : vector<8x1xf32>
      %c0_32 = arith.constant 0 : index
      %c0_33 = arith.constant 0 : index
      %48 = vector.load %arg8[%c0_32, %c0_33] : memref<8x1xf32, #tpu.memory_space<vmem>>, vector<8x1xf32>
      %cst_34 = arith.constant 0.899999976 : f32
      %49 = vector.broadcast %cst_34 : f32 to vector<8x1xf32>
      %50 = arith.mulf %49, %48 : vector<8x1xf32>
      %51 = arith.subf %47, %50 : vector<8x1xf32>
      %c0_35 = arith.constant 0 : index
      %c0_36 = arith.constant 0 : index
      %52 = vector.load %arg7[%c0_35, %c0_36] : memref<8x1xf32, #tpu.memory_space<vmem>>, vector<8x1xf32>
      %cst_37 = arith.constant 6.250000e-03 : f32
      %53 = vector.broadcast %cst_37 : f32 to vector<8x1xf32>
      %54 = arith.mulf %53, %52 : vector<8x1xf32>
      %55 = arith.subf %51, %54 : vector<8x1xf32>
      %c0_38 = arith.constant 0 : index
      %c0_39 = arith.constant 0 : index
      %56 = vector.load %arg4[%c0_38, %c0_39] : memref<8x1xf32, #tpu.memory_space<vmem>>, vector<8x1xf32>
      tpu.vector_store %arg4[%c0_38, %c0_39], %55 {strides = array<i32>} : memref<8x1xf32, #tpu.memory_space<vmem>>, vector<8x1xf32>,
    } else {
    }
    return
  }
  func.func @transform_0(%arg0: i32, %arg1: i32) -> (i32, i32) {
    %c0_i32 = arith.constant 0 : i32
    return %arg0, %arg1 : i32, i32
  }
  func.func @transform_1(%arg0: i32, %arg1: i32) -> (i32, i32) {
    %c0_i32 = arith.constant 0 : i32
    %c0_i32_0 = arith.constant 0 : i32
    return %arg0, %c0_i32 : i32, i32
  }
  func.func @transform_2(%arg0: i32, %arg1: i32) -> (i32, i32) {
    %c0_i32 = arith.constant 0 : i32
    %c0_i32_0 = arith.constant 0 : i32
    return %arg0, %c0_i32 : i32, i32
  }
}

</mosaic_0001>

<llo_original>
// kernel: tpu_custom_call.1
$region0: #{tpu_custom_call.1}
  #allocation0 [shape = 'u32[]', space=smem, size = 0x4, offset = 0x4, fixed_abs, tag = 'smem constant byte address 0x4 - core index']
  #allocation1 [shape = 'u32[144,128]{1,0:T(1,128)}', space=vmem, size = 0x12000, scoped, tag = 'internal scratch']
  #allocation2 [shape = 'f32[8,1]{1,0:T(8,128)}', space=vmem, size = 0x1000, scoped, tag = 'scratch operand']
  #allocation3 [shape = 'f32[8,1]{1,0:T(8,128)}', space=vmem, size = 0x1000, scoped, tag = 'scratch operand']
  #allocation4 [shape = 'f32[8,1]{1,0:T(8,128)}', space=vmem, size = 0x1000, scoped, tag = 'scratch operand']
  #allocation5 [shape = 'f32[8,1]{1,0:T(8,128)}', space=vmem, size = 0x1000, scoped, tag = 'scratch operand']
  %s0 = inlined_call_operand.vmem [shape: f32[8,16], index: 0, kind: input, shape index: {}]
  %s1 = inlined_call_operand.vmem [shape: s32[8,1], index: 1, kind: input, shape index: {}]
  %s2 = inlined_call_operand.vmem [shape: f32[8,1], index: 2, kind: output, shape index: {}]
  %s3 = sld [smem:[#allocation0]]
  $region26: #{tpu_custom_call.1} parent=0
    _
  %s5 = ssub.s32 1, %s3
  %s6 = scalar_select 0, %s5, %s3
  // Predicated region
  $region2: #{tpu_custom_call.1} parent=0 // pred_check
    _
  $region3: #{tpu_custom_call.1} parent=0 // pred_check_branch
    %8 = sbr.rel (0) target = $region5
  $region4: #{tpu_custom_call.1} parent=0 // pred_region
    _
  $region5: #{tpu_custom_call.1} parent=0 // pred_fallthru
    _
  // Predicated region
  $region6: #{tpu_custom_call.1} parent=0 // pred_check
    _
  $region7: #{tpu_custom_call.1} parent=0 // pred_check_branch
    %10 = sbr.rel (0) target = $region9
  $region8: #{tpu_custom_call.1} parent=0 // pred_region
    _
  $region9: #{tpu_custom_call.1} parent=0 // pred_fallthru
    _
  %p11 = scmp.eq.s32.totalorder 0, 0
  // Predicated region
  $region10: #{tpu_custom_call.1} parent=0 // pred_check
    %p12 = pneg %p11
  $region11: #{tpu_custom_call.1} parent=0 // pred_check_branch
    %14 = sbr.rel (%p12) target = $region13
  $region12: #{tpu_custom_call.1} parent=0 // pred_region
    %vm15 = vcmask 7168
    %16 = vst.msk [vmem:[#allocation2] sm:$0xff] %vm15, -inf
    %17 = vst.msk [vmem:[#allocation3] sm:$0xff] %vm15, 0.0
    %18 = vst.msk [vmem:[#allocation4] sm:$0xff] %vm15, 0.0
    %19 = vst.msk [vmem:[#allocation5] sm:$0xff] %vm15, 0.0
  $region13: #{tpu_custom_call.1} parent=0 // pred_fallthru
    _
  %v20 = vld [vmem:[%s0] sm:$0xff]
  %v21 = vlaneseq
  %v22 = vand.u32 %v21, 127
  %v23 = vld [vmem:[%s1] sm:$0xff]
  %s24 = smul.u32 0, 16
  %v25 = vstv %s24
  %v26 = vsub.s32 %v23, %v25
  %v27 = vld [vmem:[#allocation2] sm:$0xff]
  %vm28 = vcmask 130048
  %v29 = vsel %vm28, %v20, -inf
  %30 = vmax.xlane.f32.xlu0 %v29
  %v31 = vpop.xlane.xlu0 %30
  %v32 = vmax.f32 %v27, %v31
  %34 = vset.pattern.permute.xlu0 0
  %35 = vperm.xlu0 %34, %v32
  %v36 = vpop.permute.xlu0 %35
  %v38 = vsub.f32 %v20, %v36
  %v39 = vmul.f32 %v38, 1.442695
  %v40 = vpow.pop %v39
  %v41 = vld [vmem:[#allocation3] sm:$0xff]
  %v42 = vsub.f32 %v27, %v32
  %v43 = vmul.f32 %v42, 1.442695
  %v44 = vpow.pop %v43
  %v45 = vmul.f32 %v41, %v44
  %v47 = vsel %vm28, %v40, 0
  %49 = vmatprep.subr.mxu0 0.0
  %50 = vmatpush1.msra.mxu0 0.0
  %51 = vmatprep.subr.mxu0 0.0
  %52 = vmatpush1.msra.mxu0 0.0
  %53 = vmatprep.subr.mxu0 0.0
  %54 = vmatpush1.msra.mxu0 0.0
  %55 = vmatprep.subr.mxu0 0.0
  %56 = vmatpush1.msra.mxu0 0.0
  %57 = vmatprep.subr.mxu0 0.0
  %58 = vmatpush1.msra.mxu0 0.0
  %59 = vmatprep.subr.mxu0 0.0
  %60 = vmatpush1.msra.mxu0 0.0
  %61 = vmatprep.subr.mxu0 0.0
  %62 = vmatpush1.msra.mxu0 0.0
  %63 = vmatprep.subr.mxu0 0.0
  %64 = vmatpush1.msra.mxu0 0.0
  %65 = vmatprep.subr.mxu0 0.0
  %66 = vmatpush1.msra.mxu0 0.0
  %67 = vmatprep.subr.mxu0 0.0
  %68 = vmatpush1.msra.mxu0 0.0
  %69 = vmatprep.subr.mxu0 0.0
  %70 = vmatpush1.msra.mxu0 0.0
  %71 = vmatprep.subr.mxu0 0.0
  %72 = vmatpush1.msra.mxu0 0.0
  %73 = vmatprep.subr.mxu0 0.0
  %74 = vmatpush1.msra.mxu0 0.0
  %75 = vmatprep.subr.mxu0 0.0
  %76 = vmatpush1.msra.mxu0 0.0
  %77 = vmatprep.subr.mxu0 0.0
  %78 = vmatpush1.msra.mxu0 1.0
  %79 = vmatprep.subr.mxu0 0.0
  %80 = vmatpush1.msra.mxu0 1.0
  %81 = vmatprep.subr.mxu0 0.0
  %82 = vmatpush2.msra.mxu0 0.0
  %83 = vmatprep.subr.mxu0 0.0
  %84 = vmatpush2.msra.mxu0 0.0
  %85 = vmatprep.subr.mxu0 0.0
  %86 = vmatpush2.msra.mxu0 0.0
  %87 = vmatprep.subr.mxu0 0.0
  %88 = vmatpush2.msra.mxu0 0.0
  %89 = vmatprep.subr.mxu0 0.0
  %90 = vmatpush2.msra.mxu0 0.0
  %91 = vmatprep.subr.mxu0 0.0
  %92 = vmatpush2.msra.mxu0 0.0
  %93 = vmatprep.subr.mxu0 0.0
  %94 = vmatpush2.msra.mxu0 0.0
  %95 = vmatprep.subr.mxu0 0.0
  %96 = vmatpush2.msra.mxu0 0.0
  %97 = vmatprep.subr.mxu0 0.0
  %98 = vmatpush2.msra.mxu0 0.0
  %99 = vmatprep.subr.mxu0 0.0
  %100 = vmatpush2.msra.mxu0 0.0
  %101 = vmatprep.subr.mxu0 0.0
  %102 = vmatpush2.msra.mxu0 0.0
  %103 = vmatprep.subr.mxu0 0.0
  %104 = vmatpush2.msra.mxu0 0.0
  %105 = vmatprep.subr.mxu0 0.0
  %106 = vmatpush2.msra.mxu0 0.0
  %107 = vmatprep.subr.mxu0 0.0
  %108 = vmatpush2.msra.mxu0 0.0
  %109 = vmatprep.subr.mxu0 0.0
  %110 = vmatpush2.msra.mxu0 0.0
  %111 = vmatprep.subr.mxu0 0.0
  %112 = vmatpush2.msra.mxu0 0.0
  %113 = vmatprep.mubr.f32.mxu0 0.0
  %v114 = vand.u32 %v47, 4294901760
  %v115 = vsub.f32 %v47, %v114
  %v116 = vand.u32 %v115, 4294901760
  %v117 = vsub.f32 %v115, %v116
  %v118 = vand.u32 %v117, 4294901760
  %119 = vmatmul.mubr.f32.gmra.mxu0 %v118
  %v120 = vpop.f32.mrf.mxu0
  %v121 = vadd.f32 0.0, %v120
  %v122 = vpop.f32.mrf.mxu0
  %123 = vdwg.mxu0
  %124 = vmatprep.subr.mxu0 0.0
  %125 = vmatpush1.msra.mxu0 0.0
  %126 = vmatprep.subr.mxu0 0.0
  %127 = vmatpush1.msra.mxu0 0.0
  %128 = vmatprep.subr.mxu0 0.0
  %129 = vmatpush1.msra.mxu0 0.0
  %130 = vmatprep.subr.mxu0 0.0
  %131 = vmatpush1.msra.mxu0 0.0
  %132 = vmatprep.subr.mxu0 0.0
  %133 = vmatpush1.msra.mxu0 0.0
  %134 = vmatprep.subr.mxu0 0.0
  %135 = vmatpush1.msra.mxu0 0.0
  %136 = vmatprep.subr.mxu0 0.0
  %137 = vmatpush1.msra.mxu0 0.0
  %138 = vmatprep.subr.mxu0 0.0
  %139 = vmatpush1.msra.mxu0 0.0
  %140 = vmatprep.subr.mxu0 0.0
  %141 = vmatpush1.msra.mxu0 0.0
  %142 = vmatprep.subr.mxu0 0.0
  %143 = vmatpush1.msra.mxu0 0.0
  %144 = vmatprep.subr.mxu0 0.0
  %145 = vmatpush1.msra.mxu0 0.0
  %146 = vmatprep.subr.mxu0 0.0
  %147 = vmatpush1.msra.mxu0 0.0
  %148 = vmatprep.subr.mxu0 0.0
  %149 = vmatpush1.msra.mxu0 0.0
  %150 = vmatprep.subr.mxu0 0.0
  %151 = vmatpush1.msra.mxu0 0.0
  %152 = vmatprep.subr.mxu0 0.0
  %153 = vmatpush1.msra.mxu0 0.0
  %154 = vmatprep.subr.mxu0 0.0
  %155 = vmatpush1.msra.mxu0 0.0
  %156 = vmatprep.subr.mxu0 0.0
  %157 = vmatpush2.msra.mxu0 0.0
  %158 = vmatprep.subr.mxu0 0.0
  %159 = vmatpush2.msra.mxu0 0.0
  %160 = vmatprep.subr.mxu0 0.0
  %161 = vmatpush2.msra.mxu0 0.0
  %162 = vmatprep.subr.mxu0 0.0
  %163 = vmatpush2.msra.mxu0 0.0
  %164 = vmatprep.subr.mxu0 0.0
  %165 = vmatpush2.msra.mxu0 0.0
  %166 = vmatprep.subr.mxu0 0.0
  %167 = vmatpush2.msra.mxu0 0.0
  %168 = vmatprep.subr.mxu0 0.0
  %169 = vmatpush2.msra.mxu0 0.0
  %170 = vmatprep.subr.mxu0 0.0
  %171 = vmatpush2.msra.mxu0 0.0
  %172 = vmatprep.subr.mxu0 0.0
  %173 = vmatpush2.msra.mxu0 0.0
  %174 = vmatprep.subr.mxu0 0.0
  %175 = vmatpush2.msra.mxu0 0.0
  %176 = vmatprep.subr.mxu0 0.0
  %177 = vmatpush2.msra.mxu0 0.0
  %178 = vmatprep.subr.mxu0 0.0
  %179 = vmatpush2.msra.mxu0 0.0
  %180 = vmatprep.subr.mxu0 0.0
  %181 = vmatpush2.msra.mxu0 0.0
  %182 = vmatprep.subr.mxu0 0.0
  %183 = vmatpush2.msra.mxu0 0.0
  %184 = vmatprep.subr.mxu0 0.0
  %185 = vmatpush2.msra.mxu0 0.0
  %186 = vmatprep.subr.mxu0 0.0
  %187 = vmatpush2.msra.mxu0 0.0
  %188 = vmatprep.mubr.f32.mxu0 0.0
  %v189 = vand.u32 %v47, 4294901760
  %190 = vmatmul.mubr.f32.gmra.mxu0 %v189
  %v191 = vpop.f32.mrf.mxu0
  %v192 = vadd.f32 %v121, %v191
  %v193 = vpop.f32.mrf.mxu0
  %194 = vdwg.mxu0
  %195 = vmatprep.subr.mxu0 0.0
  %196 = vmatpush1.msra.mxu0 0.0
  %197 = vmatprep.subr.mxu0 0.0
  %198 = vmatpush1.msra.mxu0 0.0
  %199 = vmatprep.subr.mxu0 0.0
  %200 = vmatpush1.msra.mxu0 0.0
  %201 = vmatprep.subr.mxu0 0.0
  %202 = vmatpush1.msra.mxu0 0.0
  %203 = vmatprep.subr.mxu0 0.0
  %204 = vmatpush1.msra.mxu0 0.0
  %205 = vmatprep.subr.mxu0 0.0
  %206 = vmatpush1.msra.mxu0 0.0
  %207 = vmatprep.subr.mxu0 0.0
  %208 = vmatpush1.msra.mxu0 0.0
  %209 = vmatprep.subr.mxu0 0.0
  %210 = vmatpush1.msra.mxu0 0.0
  %211 = vmatprep.subr.mxu0 0.0
  %212 = vmatpush1.msra.mxu0 0.0
  %213 = vmatprep.subr.mxu0 0.0
  %214 = vmatpush1.msra.mxu0 0.0
  %215 = vmatprep.subr.mxu0 0.0
  %216 = vmatpush1.msra.mxu0 0.0
  %217 = vmatprep.subr.mxu0 0.0
  %218 = vmatpush1.msra.mxu0 0.0
  %219 = vmatprep.subr.mxu0 0.0
  %220 = vmatpush1.msra.mxu0 0.0
  %221 = vmatprep.subr.mxu0 0.0
  %222 = vmatpush1.msra.mxu0 0.0
  %223 = vmatprep.subr.mxu0 0.0
  %224 = vmatpush1.msra.mxu0 0.0
  %225 = vmatprep.subr.mxu0 0.0
  %226 = vmatpush1.msra.mxu0 0.0
  %227 = vmatprep.subr.mxu0 0.0
  %228 = vmatpush2.msra.mxu0 0.0
  %229 = vmatprep.subr.mxu0 0.0
  %230 = vmatpush2.msra.mxu0 0.0
  %231 = vmatprep.subr.mxu0 0.0
  %232 = vmatpush2.msra.mxu0 0.0
  %233 = vmatprep.subr.mxu0 0.0
  %234 = vmatpush2.msra.mxu0 0.0
  %235 = vmatprep.subr.mxu0 0.0
  %236 = vmatpush2.msra.mxu0 0.0
  %237 = vmatprep.subr.mxu0 0.0
  %238 = vmatpush2.msra.mxu0 0.0
  %239 = vmatprep.subr.mxu0 0.0
  %240 = vmatpush2.msra.mxu0 0.0
  %241 = vmatprep.subr.mxu0 0.0
  %242 = vmatpush2.msra.mxu0 0.0
  %243 = vmatprep.subr.mxu0 0.0
  %244 = vmatpush2.msra.mxu0 0.0
  %245 = vmatprep.subr.mxu0 0.0
  %246 = vmatpush2.msra.mxu0 0.0
  %247 = vmatprep.subr.mxu0 0.0
  %248 = vmatpush2.msra.mxu0 0.0
  %249 = vmatprep.subr.mxu0 0.0
  %250 = vmatpush2.msra.mxu0 0.0
  %251 = vmatprep.subr.mxu0 0.0
  %252 = vmatpush2.msra.mxu0 0.0
  %253 = vmatprep.subr.mxu0 0.0
  %254 = vmatpush2.msra.mxu0 0.0
  %255 = vmatprep.subr.mxu0 0.0
  %256 = vmatpush2.msra.mxu0 0.0
  %257 = vmatprep.subr.mxu0 0.0
  %258 = vmatpush2.msra.mxu0 0.0
  %259 = vmatprep.mubr.f32.mxu0 0.0
  %v260 = vand.u32 %v47, 4294901760
  %v261 = vsub.f32 %v47, %v260
  %262 = vmatmul.mubr.f32.gmra.mxu0 %v261
  %v263 = vpop.f32.mrf.mxu0
  %v264 = vadd.f32 %v192, %v263
  %v265 = vpop.f32.mrf.mxu0
  %266 = vdwg.mxu0
  %267 = vmatprep.subr.mxu0 0.0
  %268 = vmatpush1.msra.mxu0 0.0
  %269 = vmatprep.subr.mxu0 0.0
  %270 = vmatpush1.msra.mxu0 0.0
  %271 = vmatprep.subr.mxu0 0.0
  %272 = vmatpush1.msra.mxu0 0.0
  %273 = vmatprep.subr.mxu0 0.0
  %274 = vmatpush1.msra.mxu0 0.0
  %275 = vmatprep.subr.mxu0 0.0
  %276 = vmatpush1.msra.mxu0 0.0
  %277 = vmatprep.subr.mxu0 0.0
  %278 = vmatpush1.msra.mxu0 0.0
  %279 = vmatprep.subr.mxu0 0.0
  %280 = vmatpush1.msra.mxu0 0.0
  %281 = vmatprep.subr.mxu0 0.0
  %282 = vmatpush1.msra.mxu0 0.0
  %283 = vmatprep.subr.mxu0 0.0
  %284 = vmatpush1.msra.mxu0 0.0
  %285 = vmatprep.subr.mxu0 0.0
  %286 = vmatpush1.msra.mxu0 0.0
  %287 = vmatprep.subr.mxu0 0.0
  %288 = vmatpush1.msra.mxu0 0.0
  %289 = vmatprep.subr.mxu0 0.0
  %290 = vmatpush1.msra.mxu0 0.0
  %291 = vmatprep.subr.mxu0 0.0
  %292 = vmatpush1.msra.mxu0 0.0
  %293 = vmatprep.subr.mxu0 0.0
  %294 = vmatpush1.msra.mxu0 0.0
  %295 = vmatprep.subr.mxu0 0.0
  %296 = vmatpush1.msra.mxu0 1.0
  %297 = vmatprep.subr.mxu0 0.0
  %298 = vmatpush1.msra.mxu0 1.0
  %299 = vmatprep.subr.mxu0 0.0
  %300 = vmatpush2.msra.mxu0 0.0
  %301 = vmatprep.subr.mxu0 0.0
  %302 = vmatpush2.msra.mxu0 0.0
  %303 = vmatprep.subr.mxu0 0.0
  %304 = vmatpush2.msra.mxu0 0.0
  %305 = vmatprep.subr.mxu0 0.0
  %306 = vmatpush2.msra.mxu0 0.0
  %307 = vmatprep.subr.mxu0 0.0
  %308 = vmatpush2.msra.mxu0 0.0
  %309 = vmatprep.subr.mxu0 0.0
  %310 = vmatpush2.msra.mxu0 0.0
  %311 = vmatprep.subr.mxu0 0.0
  %312 = vmatpush2.msra.mxu0 0.0
  %313 = vmatprep.subr.mxu0 0.0
  %314 = vmatpush2.msra.mxu0 0.0
  %315 = vmatprep.subr.mxu0 0.0
  %316 = vmatpush2.msra.mxu0 0.0
  %317 = vmatprep.subr.mxu0 0.0
  %318 = vmatpush2.msra.mxu0 0.0
  %319 = vmatprep.subr.mxu0 0.0
  %320 = vmatpush2.msra.mxu0 0.0
  %321 = vmatprep.subr.mxu0 0.0
  %322 = vmatpush2.msra.mxu0 0.0
  %323 = vmatprep.subr.mxu0 0.0
  %324 = vmatpush2.msra.mxu0 0.0
  %325 = vmatprep.subr.mxu0 0.0
  %326 = vmatpush2.msra.mxu0 0.0
  %327 = vmatprep.subr.mxu0 0.0
  %328 = vmatpush2.msra.mxu0 0.0
  %329 = vmatprep.subr.mxu0 0.0
  %330 = vmatpush2.msra.mxu0 0.0
  %331 = vmatprep.mubr.f32.mxu0 0.0
  %v332 = vand.u32 %v47, 4294901760
  %v333 = vsub.f32 %v47, %v332
  %v334 = vand.u32 %v333, 4294901760
  %335 = vmatmul.mubr.f32.gmra.mxu0 %v334
  %v336 = vpop.f32.mrf.mxu0
  %v337 = vadd.f32 %v264, %v336
  %v338 = vpop.f32.mrf.mxu0
  %339 = vdwg.mxu0
  %340 = vmatprep.subr.mxu0 0.0
  %341 = vmatpush1.msra.mxu0 0.0
  %342 = vmatprep.subr.mxu0 0.0
  %343 = vmatpush1.msra.mxu0 0.0
  %344 = vmatprep.subr.mxu0 0.0
  %345 = vmatpush1.msra.mxu0 0.0
  %346 = vmatprep.subr.mxu0 0.0
  %347 = vmatpush1.msra.mxu0 0.0
  %348 = vmatprep.subr.mxu0 0.0
  %349 = vmatpush1.msra.mxu0 0.0
  %350 = vmatprep.subr.mxu0 0.0
  %351 = vmatpush1.msra.mxu0 0.0
  %352 = vmatprep.subr.mxu0 0.0
  %353 = vmatpush1.msra.mxu0 0.0
  %354 = vmatprep.subr.mxu0 0.0
  %355 = vmatpush1.msra.mxu0 0.0
  %356 = vmatprep.subr.mxu0 0.0
  %357 = vmatpush1.msra.mxu0 0.0
  %358 = vmatprep.subr.mxu0 0.0
  %359 = vmatpush1.msra.mxu0 0.0
  %360 = vmatprep.subr.mxu0 0.0
  %361 = vmatpush1.msra.mxu0 0.0
  %362 = vmatprep.subr.mxu0 0.0
  %363 = vmatpush1.msra.mxu0 0.0
  %364 = vmatprep.subr.mxu0 0.0
  %365 = vmatpush1.msra.mxu0 0.0
  %366 = vmatprep.subr.mxu0 0.0
  %367 = vmatpush1.msra.mxu0 0.0
  %368 = vmatprep.subr.mxu0 0.0
  %369 = vmatpush1.msra.mxu0 0.0
  %370 = vmatprep.subr.mxu0 0.0
  %371 = vmatpush1.msra.mxu0 0.0
  %372 = vmatprep.subr.mxu0 0.0
  %373 = vmatpush2.msra.mxu0 0.0
  %374 = vmatprep.subr.mxu0 0.0
  %375 = vmatpush2.msra.mxu0 0.0
  %376 = vmatprep.subr.mxu0 0.0
  %377 = vmatpush2.msra.mxu0 0.0
  %378 = vmatprep.subr.mxu0 0.0
  %379 = vmatpush2.msra.mxu0 0.0
  %380 = vmatprep.subr.mxu0 0.0
  %381 = vmatpush2.msra.mxu0 0.0
  %382 = vmatprep.subr.mxu0 0.0
  %383 = vmatpush2.msra.mxu0 0.0
  %384 = vmatprep.subr.mxu0 0.0
  %385 = vmatpush2.msra.mxu0 0.0
  %386 = vmatprep.subr.mxu0 0.0
  %387 = vmatpush2.msra.mxu0 0.0
  %388 = vmatprep.subr.mxu0 0.0
  %389 = vmatpush2.msra.mxu0 0.0
  %390 = vmatprep.subr.mxu0 0.0
  %391 = vmatpush2.msra.mxu0 0.0
  %392 = vmatprep.subr.mxu0 0.0
  %393 = vmatpush2.msra.mxu0 0.0
  %394 = vmatprep.subr.mxu0 0.0
  %395 = vmatpush2.msra.mxu0 0.0
  %396 = vmatprep.subr.mxu0 0.0
  %397 = vmatpush2.msra.mxu0 0.0
  %398 = vmatprep.subr.mxu0 0.0
  %399 = vmatpush2.msra.mxu0 0.0
  %400 = vmatprep.subr.mxu0 0.0
  %401 = vmatpush2.msra.mxu0 0.0
  %402 = vmatprep.subr.mxu0 0.0
  %403 = vmatpush2.msra.mxu0 0.0
  %404 = vmatprep.mubr.f32.mxu0 0.0
  %v405 = vand.u32 %v47, 4294901760
  %406 = vmatmul.mubr.f32.gmra.mxu0 %v405
  %v407 = vpop.f32.mrf.mxu0
  %v408 = vadd.f32 %v337, %v407
  %v409 = vpop.f32.mrf.mxu0
  %410 = vdwg.mxu0
  %411 = vmatprep.subr.mxu0 0.0
  %412 = vmatpush1.msra.mxu0 0.0
  %413 = vmatprep.subr.mxu0 0.0
  %414 = vmatpush1.msra.mxu0 0.0
  %415 = vmatprep.subr.mxu0 0.0
  %416 = vmatpush1.msra.mxu0 0.0
  %417 = vmatprep.subr.mxu0 0.0
  %418 = vmatpush1.msra.mxu0 0.0
  %419 = vmatprep.subr.mxu0 0.0
  %420 = vmatpush1.msra.mxu0 0.0
  %421 = vmatprep.subr.mxu0 0.0
  %422 = vmatpush1.msra.mxu0 0.0
  %423 = vmatprep.subr.mxu0 0.0
  %424 = vmatpush1.msra.mxu0 0.0
  %425 = vmatprep.subr.mxu0 0.0
  %426 = vmatpush1.msra.mxu0 0.0
  %427 = vmatprep.subr.mxu0 0.0
  %428 = vmatpush1.msra.mxu0 0.0
  %429 = vmatprep.subr.mxu0 0.0
  %430 = vmatpush1.msra.mxu0 0.0
  %431 = vmatprep.subr.mxu0 0.0
  %432 = vmatpush1.msra.mxu0 0.0
  %433 = vmatprep.subr.mxu0 0.0
  %434 = vmatpush1.msra.mxu0 0.0
  %435 = vmatprep.subr.mxu0 0.0
  %436 = vmatpush1.msra.mxu0 0.0
  %437 = vmatprep.subr.mxu0 0.0
  %438 = vmatpush1.msra.mxu0 0.0
  %439 = vmatprep.subr.mxu0 0.0
  %440 = vmatpush1.msra.mxu0 1.0
  %441 = vmatprep.subr.mxu0 0.0
  %442 = vmatpush1.msra.mxu0 1.0
  %443 = vmatprep.subr.mxu0 0.0
  %444 = vmatpush2.msra.mxu0 0.0
  %445 = vmatprep.subr.mxu0 0.0
  %446 = vmatpush2.msra.mxu0 0.0
  %447 = vmatprep.subr.mxu0 0.0
  %448 = vmatpush2.msra.mxu0 0.0
  %449 = vmatprep.subr.mxu0 0.0
  %450 = vmatpush2.msra.mxu0 0.0
  %451 = vmatprep.subr.mxu0 0.0
  %452 = vmatpush2.msra.mxu0 0.0
  %453 = vmatprep.subr.mxu0 0.0
  %454 = vmatpush2.msra.mxu0 0.0
  %455 = vmatprep.subr.mxu0 0.0
  %456 = vmatpush2.msra.mxu0 0.0
  %457 = vmatprep.subr.mxu0 0.0
  %458 = vmatpush2.msra.mxu0 0.0
  %459 = vmatprep.subr.mxu0 0.0
  %460 = vmatpush2.msra.mxu0 0.0
  %461 = vmatprep.subr.mxu0 0.0
  %462 = vmatpush2.msra.mxu0 0.0
  %463 = vmatprep.subr.mxu0 0.0
  %464 = vmatpush2.msra.mxu0 0.0
  %465 = vmatprep.subr.mxu0 0.0
  %466 = vmatpush2.msra.mxu0 0.0
  %467 = vmatprep.subr.mxu0 0.0
  %468 = vmatpush2.msra.mxu0 0.0
  %469 = vmatprep.subr.mxu0 0.0
  %470 = vmatpush2.msra.mxu0 0.0
  %471 = vmatprep.subr.mxu0 0.0
  %472 = vmatpush2.msra.mxu0 0.0
  %473 = vmatprep.subr.mxu0 0.0
  %474 = vmatpush2.msra.mxu0 0.0
  %475 = vmatprep.mubr.f32.mxu0 0.0
  %v476 = vand.u32 %v47, 4294901760
  %477 = vmatmul.mubr.f32.gmra.mxu0 %v476
  %v478 = vpop.f32.mrf.mxu0
  %v479 = vadd.f32 %v408, %v478
  %v480 = vpop.f32.mrf.mxu0
  %481 = vdwg.mxu0
  %v482 = vadd.f32 %v45, %v479
  %vm483 = vcmask 7168
  %484 = vst.msk [vmem:[#allocation3] sm:$0xff] %vm483, %v482
  %485 = vst.msk [vmem:[#allocation2] sm:$0xff] %vm483, %v32
  %v486 = vld [vmem:[#allocation4] sm:$0xff]
  %v488 = vsel %vm28, %v20, 0
  %490 = vmatprep.subr.mxu0 0.0
  %491 = vmatpush1.msra.mxu0 0.0
  %492 = vmatprep.subr.mxu0 0.0
  %493 = vmatpush1.msra.mxu0 0.0
  %494 = vmatprep.subr.mxu0 0.0
  %495 = vmatpush1.msra.mxu0 0.0
  %496 = vmatprep.subr.mxu0 0.0
  %497 = vmatpush1.msra.mxu0 0.0
  %498 = vmatprep.subr.mxu0 0.0
  %499 = vmatpush1.msra.mxu0 0.0
  %500 = vmatprep.subr.mxu0 0.0
  %501 = vmatpush1.msra.mxu0 0.0
  %502 = vmatprep.subr.mxu0 0.0
  %503 = vmatpush1.msra.mxu0 0.0
  %504 = vmatprep.subr.mxu0 0.0
  %505 = vmatpush1.msra.mxu0 0.0
  %506 = vmatprep.subr.mxu0 0.0
  %507 = vmatpush1.msra.mxu0 0.0
  %508 = vmatprep.subr.mxu0 0.0
  %509 = vmatpush1.msra.mxu0 0.0
  %510 = vmatprep.subr.mxu0 0.0
  %511 = vmatpush1.msra.mxu0 0.0
  %512 = vmatprep.subr.mxu0 0.0
  %513 = vmatpush1.msra.mxu0 0.0
  %514 = vmatprep.subr.mxu0 0.0
  %515 = vmatpush1.msra.mxu0 0.0
  %516 = vmatprep.subr.mxu0 0.0
  %517 = vmatpush1.msra.mxu0 0.0
  %518 = vmatprep.subr.mxu0 0.0
  %519 = vmatpush1.msra.mxu0 1.0
  %520 = vmatprep.subr.mxu0 0.0
  %521 = vmatpush1.msra.mxu0 1.0
  %522 = vmatprep.subr.mxu0 0.0
  %523 = vmatpush2.msra.mxu0 0.0
  %524 = vmatprep.subr.mxu0 0.0
  %525 = vmatpush2.msra.mxu0 0.0
  %526 = vmatprep.subr.mxu0 0.0
  %527 = vmatpush2.msra.mxu0 0.0
  %528 = vmatprep.subr.mxu0 0.0
  %529 = vmatpush2.msra.mxu0 0.0
  %530 = vmatprep.subr.mxu0 0.0
  %531 = vmatpush2.msra.mxu0 0.0
  %532 = vmatprep.subr.mxu0 0.0
  %533 = vmatpush2.msra.mxu0 0.0
  %534 = vmatprep.subr.mxu0 0.0
  %535 = vmatpush2.msra.mxu0 0.0
  %536 = vmatprep.subr.mxu0 0.0
  %537 = vmatpush2.msra.mxu0 0.0
  %538 = vmatprep.subr.mxu0 0.0
  %539 = vmatpush2.msra.mxu0 0.0
  %540 = vmatprep.subr.mxu0 0.0
  %541 = vmatpush2.msra.mxu0 0.0
  %542 = vmatprep.subr.mxu0 0.0
  %543 = vmatpush2.msra.mxu0 0.0
  %544 = vmatprep.subr.mxu0 0.0
  %545 = vmatpush2.msra.mxu0 0.0
  %546 = vmatprep.subr.mxu0 0.0
  %547 = vmatpush2.msra.mxu0 0.0
  %548 = vmatprep.subr.mxu0 0.0
  %549 = vmatpush2.msra.mxu0 0.0
  %550 = vmatprep.subr.mxu0 0.0
  %551 = vmatpush2.msra.mxu0 0.0
  %552 = vmatprep.subr.mxu0 0.0
  %553 = vmatpush2.msra.mxu0 0.0
  %554 = vmatprep.mubr.f32.mxu0 0.0
  %v555 = vand.u32 %v488, 4294901760
  %v556 = vsub.f32 %v488, %v555
  %v557 = vand.u32 %v556, 4294901760
  %v558 = vsub.f32 %v556, %v557
  %v559 = vand.u32 %v558, 4294901760
  %560 = vmatmul.mubr.f32.gmra.mxu0 %v559
  %v561 = vpop.f32.mrf.mxu0
  %v562 = vadd.f32 0.0, %v561
  %v563 = vpop.f32.mrf.mxu0
  %564 = vdwg.mxu0
  %565 = vmatprep.subr.mxu0 0.0
  %566 = vmatpush1.msra.mxu0 0.0
  %567 = vmatprep.subr.mxu0 0.0
  %568 = vmatpush1.msra.mxu0 0.0
  %569 = vmatprep.subr.mxu0 0.0
  %570 = vmatpush1.msra.mxu0 0.0
  %571 = vmatprep.subr.mxu0 0.0
  %572 = vmatpush1.msra.mxu0 0.0
  %573 = vmatprep.subr.mxu0 0.0
  %574 = vmatpush1.msra.mxu0 0.0
  %575 = vmatprep.subr.mxu0 0.0
  %576 = vmatpush1.msra.mxu0 0.0
  %577 = vmatprep.subr.mxu0 0.0
  %578 = vmatpush1.msra.mxu0 0.0
  %579 = vmatprep.subr.mxu0 0.0
  %580 = vmatpush1.msra.mxu0 0.0
  %581 = vmatprep.subr.mxu0 0.0
  %582 = vmatpush1.msra.mxu0 0.0
  %583 = vmatprep.subr.mxu0 0.0
  %584 = vmatpush1.msra.mxu0 0.0
  %585 = vmatprep.subr.mxu0 0.0
  %586 = vmatpush1.msra.mxu0 0.0
  %587 = vmatprep.subr.mxu0 0.0
  %588 = vmatpush1.msra.mxu0 0.0
  %589 = vmatprep.subr.mxu0 0.0
  %590 = vmatpush1.msra.mxu0 0.0
  %591 = vmatprep.subr.mxu0 0.0
  %592 = vmatpush1.msra.mxu0 0.0
  %593 = vmatprep.subr.mxu0 0.0
  %594 = vmatpush1.msra.mxu0 0.0
  %595 = vmatprep.subr.mxu0 0.0
  %596 = vmatpush1.msra.mxu0 0.0
  %597 = vmatprep.subr.mxu0 0.0
  %598 = vmatpush2.msra.mxu0 0.0
  %599 = vmatprep.subr.mxu0 0.0
  %600 = vmatpush2.msra.mxu0 0.0
  %601 = vmatprep.subr.mxu0 0.0
  %602 = vmatpush2.msra.mxu0 0.0
  %603 = vmatprep.subr.mxu0 0.0
  %604 = vmatpush2.msra.mxu0 0.0
  %605 = vmatprep.subr.mxu0 0.0
  %606 = vmatpush2.msra.mxu0 0.0
  %607 = vmatprep.subr.mxu0 0.0
  %608 = vmatpush2.msra.mxu0 0.0
  %609 = vmatprep.subr.mxu0 0.0
  %610 = vmatpush2.msra.mxu0 0.0
  %611 = vmatprep.subr.mxu0 0.0
  %612 = vmatpush2.msra.mxu0 0.0
  %613 = vmatprep.subr.mxu0 0.0
  %614 = vmatpush2.msra.mxu0 0.0
  %615 = vmatprep.subr.mxu0 0.0
  %616 = vmatpush2.msra.mxu0 0.0
  %617 = vmatprep.subr.mxu0 0.0
  %618 = vmatpush2.msra.mxu0 0.0
  %619 = vmatprep.subr.mxu0 0.0
  %620 = vmatpush2.msra.mxu0 0.0
  %621 = vmatprep.subr.mxu0 0.0
  %622 = vmatpush2.msra.mxu0 0.0
  %623 = vmatprep.subr.mxu0 0.0
  %624 = vmatpush2.msra.mxu0 0.0
  %625 = vmatprep.subr.mxu0 0.0
  %626 = vmatpush2.msra.mxu0 0.0
  %627 = vmatprep.subr.mxu0 0.0
  %628 = vmatpush2.msra.mxu0 0.0
  %629 = vmatprep.mubr.f32.mxu0 0.0
  %v630 = vand.u32 %v488, 4294901760
  %631 = vmatmul.mubr.f32.gmra.mxu0 %v630
  %v632 = vpop.f32.mrf.mxu0
  %v633 = vadd.f32 %v562, %v632
  %v634 = vpop.f32.mrf.mxu0
  %635 = vdwg.mxu0
  %636 = vmatprep.subr.mxu0 0.0
  %637 = vmatpush1.msra.mxu0 0.0
  %638 = vmatprep.subr.mxu0 0.0
  %639 = vmatpush1.msra.mxu0 0.0
  %640 = vmatprep.subr.mxu0 0.0
  %641 = vmatpush1.msra.mxu0 0.0
  %642 = vmatprep.subr.mxu0 0.0
  %643 = vmatpush1.msra.mxu0 0.0
  %644 = vmatprep.subr.mxu0 0.0
  %645 = vmatpush1.msra.mxu0 0.0
  %646 = vmatprep.subr.mxu0 0.0
  %647 = vmatpush1.msra.mxu0 0.0
  %648 = vmatprep.subr.mxu0 0.0
  %649 = vmatpush1.msra.mxu0 0.0
  %650 = vmatprep.subr.mxu0 0.0
  %651 = vmatpush1.msra.mxu0 0.0
  %652 = vmatprep.subr.mxu0 0.0
  %653 = vmatpush1.msra.mxu0 0.0
  %654 = vmatprep.subr.mxu0 0.0
  %655 = vmatpush1.msra.mxu0 0.0
  %656 = vmatprep.subr.mxu0 0.0
  %657 = vmatpush1.msra.mxu0 0.0
  %658 = vmatprep.subr.mxu0 0.0
  %659 = vmatpush1.msra.mxu0 0.0
  %660 = vmatprep.subr.mxu0 0.0
  %661 = vmatpush1.msra.mxu0 0.0
  %662 = vmatprep.subr.mxu0 0.0
  %663 = vmatpush1.msra.mxu0 0.0
  %664 = vmatprep.subr.mxu0 0.0
  %665 = vmatpush1.msra.mxu0 0.0
  %666 = vmatprep.subr.mxu0 0.0
  %667 = vmatpush1.msra.mxu0 0.0
  %668 = vmatprep.subr.mxu0 0.0
  %669 = vmatpush2.msra.mxu0 0.0
  %670 = vmatprep.subr.mxu0 0.0
  %671 = vmatpush2.msra.mxu0 0.0
  %672 = vmatprep.subr.mxu0 0.0
  %673 = vmatpush2.msra.mxu0 0.0
  %674 = vmatprep.subr.mxu0 0.0
  %675 = vmatpush2.msra.mxu0 0.0
  %676 = vmatprep.subr.mxu0 0.0
  %677 = vmatpush2.msra.mxu0 0.0
  %678 = vmatprep.subr.mxu0 0.0
  %679 = vmatpush2.msra.mxu0 0.0
  %680 = vmatprep.subr.mxu0 0.0
  %681 = vmatpush2.msra.mxu0 0.0
  %682 = vmatprep.subr.mxu0 0.0
  %683 = vmatpush2.msra.mxu0 0.0
  %684 = vmatprep.subr.mxu0 0.0
  %685 = vmatpush2.msra.mxu0 0.0
  %686 = vmatprep.subr.mxu0 0.0
  %687 = vmatpush2.msra.mxu0 0.0
  %688 = vmatprep.subr.mxu0 0.0
  %689 = vmatpush2.msra.mxu0 0.0
  %690 = vmatprep.subr.mxu0 0.0
  %691 = vmatpush2.msra.mxu0 0.0
  %692 = vmatprep.subr.mxu0 0.0
  %693 = vmatpush2.msra.mxu0 0.0
  %694 = vmatprep.subr.mxu0 0.0
  %695 = vmatpush2.msra.mxu0 0.0
  %696 = vmatprep.subr.mxu0 0.0
  %697 = vmatpush2.msra.mxu0 0.0
  %698 = vmatprep.subr.mxu0 0.0
  %699 = vmatpush2.msra.mxu0 0.0
  %700 = vmatprep.mubr.f32.mxu0 0.0
  %v701 = vand.u32 %v488, 4294901760
  %v702 = vsub.f32 %v488, %v701
  %703 = vmatmul.mubr.f32.gmra.mxu0 %v702
  %v704 = vpop.f32.mrf.mxu0
  %v705 = vadd.f32 %v633, %v704
  %v706 = vpop.f32.mrf.mxu0
  %707 = vdwg.mxu0
  %708 = vmatprep.subr.mxu0 0.0
  %709 = vmatpush1.msra.mxu0 0.0
  %710 = vmatprep.subr.mxu0 0.0
  %711 = vmatpush1.msra.mxu0 0.0
  %712 = vmatprep.subr.mxu0 0.0
  %713 = vmatpush1.msra.mxu0 0.0
  %714 = vmatprep.subr.mxu0 0.0
  %715 = vmatpush1.msra.mxu0 0.0
  %716 = vmatprep.subr.mxu0 0.0
  %717 = vmatpush1.msra.mxu0 0.0
  %718 = vmatprep.subr.mxu0 0.0
  %719 = vmatpush1.msra.mxu0 0.0
  %720 = vmatprep.subr.mxu0 0.0
  %721 = vmatpush1.msra.mxu0 0.0
  %722 = vmatprep.subr.mxu0 0.0
  %723 = vmatpush1.msra.mxu0 0.0
  %724 = vmatprep.subr.mxu0 0.0
  %725 = vmatpush1.msra.mxu0 0.0
  %726 = vmatprep.subr.mxu0 0.0
  %727 = vmatpush1.msra.mxu0 0.0
  %728 = vmatprep.subr.mxu0 0.0
  %729 = vmatpush1.msra.mxu0 0.0
  %730 = vmatprep.subr.mxu0 0.0
  %731 = vmatpush1.msra.mxu0 0.0
  %732 = vmatprep.subr.mxu0 0.0
  %733 = vmatpush1.msra.mxu0 0.0
  %734 = vmatprep.subr.mxu0 0.0
  %735 = vmatpush1.msra.mxu0 0.0
  %736 = vmatprep.subr.mxu0 0.0
  %737 = vmatpush1.msra.mxu0 1.0
  %738 = vmatprep.subr.mxu0 0.0
  %739 = vmatpush1.msra.mxu0 1.0
  %740 = vmatprep.subr.mxu0 0.0
  %741 = vmatpush2.msra.mxu0 0.0
  %742 = vmatprep.subr.mxu0 0.0
  %743 = vmatpush2.msra.mxu0 0.0
  %744 = vmatprep.subr.mxu0 0.0
  %745 = vmatpush2.msra.mxu0 0.0
  %746 = vmatprep.subr.mxu0 0.0
  %747 = vmatpush2.msra.mxu0 0.0
  %748 = vmatprep.subr.mxu0 0.0
  %749 = vmatpush2.msra.mxu0 0.0
  %750 = vmatprep.subr.mxu0 0.0
  %751 = vmatpush2.msra.mxu0 0.0
  %752 = vmatprep.subr.mxu0 0.0
  %753 = vmatpush2.msra.mxu0 0.0
  %754 = vmatprep.subr.mxu0 0.0
  %755 = vmatpush2.msra.mxu0 0.0
  %756 = vmatprep.subr.mxu0 0.0
  %757 = vmatpush2.msra.mxu0 0.0
  %758 = vmatprep.subr.mxu0 0.0
  %759 = vmatpush2.msra.mxu0 0.0
  %760 = vmatprep.subr.mxu0 0.0
  %761 = vmatpush2.msra.mxu0 0.0
  %762 = vmatprep.subr.mxu0 0.0
  %763 = vmatpush2.msra.mxu0 0.0
  %764 = vmatprep.subr.mxu0 0.0
  %765 = vmatpush2.msra.mxu0 0.0
  %766 = vmatprep.subr.mxu0 0.0
  %767 = vmatpush2.msra.mxu0 0.0
  %768 = vmatprep.subr.mxu0 0.0
  %769 = vmatpush2.msra.mxu0 0.0
  %770 = vmatprep.subr.mxu0 0.0
  %771 = vmatpush2.msra.mxu0 0.0
  %772 = vmatprep.mubr.f32.mxu0 0.0
  %v773 = vand.u32 %v488, 4294901760
  %v774 = vsub.f32 %v488, %v773
  %v775 = vand.u32 %v774, 4294901760
  %776 = vmatmul.mubr.f32.gmra.mxu0 %v775
  %v777 = vpop.f32.mrf.mxu0
  %v778 = vadd.f32 %v705, %v777
  %v779 = vpop.f32.mrf.mxu0
  %780 = vdwg.mxu0
  %781 = vmatprep.subr.mxu0 0.0
  %782 = vmatpush1.msra.mxu0 0.0
  %783 = vmatprep.subr.mxu0 0.0
  %784 = vmatpush1.msra.mxu0 0.0
  %785 = vmatprep.subr.mxu0 0.0
  %786 = vmatpush1.msra.mxu0 0.0
  %787 = vmatprep.subr.mxu0 0.0
  %788 = vmatpush1.msra.mxu0 0.0
  %789 = vmatprep.subr.mxu0 0.0
  %790 = vmatpush1.msra.mxu0 0.0
  %791 = vmatprep.subr.mxu0 0.0
  %792 = vmatpush1.msra.mxu0 0.0
  %793 = vmatprep.subr.mxu0 0.0
  %794 = vmatpush1.msra.mxu0 0.0
  %795 = vmatprep.subr.mxu0 0.0
  %796 = vmatpush1.msra.mxu0 0.0
  %797 = vmatprep.subr.mxu0 0.0
  %798 = vmatpush1.msra.mxu0 0.0
  %799 = vmatprep.subr.mxu0 0.0
  %800 = vmatpush1.msra.mxu0 0.0
  %801 = vmatprep.subr.mxu0 0.0
  %802 = vmatpush1.msra.mxu0 0.0
  %803 = vmatprep.subr.mxu0 0.0
  %804 = vmatpush1.msra.mxu0 0.0
  %805 = vmatprep.subr.mxu0 0.0
  %806 = vmatpush1.msra.mxu0 0.0
  %807 = vmatprep.subr.mxu0 0.0
  %808 = vmatpush1.msra.mxu0 0.0
  %809 = vmatprep.subr.mxu0 0.0
  %810 = vmatpush1.msra.mxu0 0.0
  %811 = vmatprep.subr.mxu0 0.0
  %812 = vmatpush1.msra.mxu0 0.0
  %813 = vmatprep.subr.mxu0 0.0
  %814 = vmatpush2.msra.mxu0 0.0
  %815 = vmatprep.subr.mxu0 0.0
  %816 = vmatpush2.msra.mxu0 0.0
  %817 = vmatprep.subr.mxu0 0.0
  %818 = vmatpush2.msra.mxu0 0.0
  %819 = vmatprep.subr.mxu0 0.0
  %820 = vmatpush2.msra.mxu0 0.0
  %821 = vmatprep.subr.mxu0 0.0
  %822 = vmatpush2.msra.mxu0 0.0
  %823 = vmatprep.subr.mxu0 0.0
  %824 = vmatpush2.msra.mxu0 0.0
  %825 = vmatprep.subr.mxu0 0.0
  %826 = vmatpush2.msra.mxu0 0.0
  %827 = vmatprep.subr.mxu0 0.0
  %828 = vmatpush2.msra.mxu0 0.0
  %829 = vmatprep.subr.mxu0 0.0
  %830 = vmatpush2.msra.mxu0 0.0
  %831 = vmatprep.subr.mxu0 0.0
  %832 = vmatpush2.msra.mxu0 0.0
  %833 = vmatprep.subr.mxu0 0.0
  %834 = vmatpush2.msra.mxu0 0.0
  %835 = vmatprep.subr.mxu0 0.0
  %836 = vmatpush2.msra.mxu0 0.0
  %837 = vmatprep.subr.mxu0 0.0
  %838 = vmatpush2.msra.mxu0 0.0
  %839 = vmatprep.subr.mxu0 0.0
  %840 = vmatpush2.msra.mxu0 0.0
  %841 = vmatprep.subr.mxu0 0.0
  %842 = vmatpush2.msra.mxu0 0.0
  %843 = vmatprep.subr.mxu0 0.0
  %844 = vmatpush2.msra.mxu0 0.0
  %845 = vmatprep.mubr.f32.mxu0 0.0
  %v846 = vand.u32 %v488, 4294901760
  %847 = vmatmul.mubr.f32.gmra.mxu0 %v846
  %v848 = vpop.f32.mrf.mxu0
  %v849 = vadd.f32 %v778, %v848
  %v850 = vpop.f32.mrf.mxu0
  %851 = vdwg.mxu0
  %852 = vmatprep.subr.mxu0 0.0
  %853 = vmatpush1.msra.mxu0 0.0
  %854 = vmatprep.subr.mxu0 0.0
  %855 = vmatpush1.msra.mxu0 0.0
  %856 = vmatprep.subr.mxu0 0.0
  %857 = vmatpush1.msra.mxu0 0.0
  %858 = vmatprep.subr.mxu0 0.0
  %859 = vmatpush1.msra.mxu0 0.0
  %860 = vmatprep.subr.mxu0 0.0
  %861 = vmatpush1.msra.mxu0 0.0
  %862 = vmatprep.subr.mxu0 0.0
  %863 = vmatpush1.msra.mxu0 0.0
  %864 = vmatprep.subr.mxu0 0.0
  %865 = vmatpush1.msra.mxu0 0.0
  %866 = vmatprep.subr.mxu0 0.0
  %867 = vmatpush1.msra.mxu0 0.0
  %868 = vmatprep.subr.mxu0 0.0
  %869 = vmatpush1.msra.mxu0 0.0
  %870 = vmatprep.subr.mxu0 0.0
  %871 = vmatpush1.msra.mxu0 0.0
  %872 = vmatprep.subr.mxu0 0.0
  %873 = vmatpush1.msra.mxu0 0.0
  %874 = vmatprep.subr.mxu0 0.0
  %875 = vmatpush1.msra.mxu0 0.0
  %876 = vmatprep.subr.mxu0 0.0
  %877 = vmatpush1.msra.mxu0 0.0
  %878 = vmatprep.subr.mxu0 0.0
  %879 = vmatpush1.msra.mxu0 0.0
  %880 = vmatprep.subr.mxu0 0.0
  %881 = vmatpush1.msra.mxu0 1.0
  %882 = vmatprep.subr.mxu0 0.0
  %883 = vmatpush1.msra.mxu0 1.0
  %884 = vmatprep.subr.mxu0 0.0
  %885 = vmatpush2.msra.mxu0 0.0
  %886 = vmatprep.subr.mxu0 0.0
  %887 = vmatpush2.msra.mxu0 0.0
  %888 = vmatprep.subr.mxu0 0.0
  %889 = vmatpush2.msra.mxu0 0.0
  %890 = vmatprep.subr.mxu0 0.0
  %891 = vmatpush2.msra.mxu0 0.0
  %892 = vmatprep.subr.mxu0 0.0
  %893 = vmatpush2.msra.mxu0 0.0
  %894 = vmatprep.subr.mxu0 0.0
  %895 = vmatpush2.msra.mxu0 0.0
  %896 = vmatprep.subr.mxu0 0.0
  %897 = vmatpush2.msra.mxu0 0.0
  %898 = vmatprep.subr.mxu0 0.0
  %899 = vmatpush2.msra.mxu0 0.0
  %900 = vmatprep.subr.mxu0 0.0
  %901 = vmatpush2.msra.mxu0 0.0
  %902 = vmatprep.subr.mxu0 0.0
  %903 = vmatpush2.msra.mxu0 0.0
  %904 = vmatprep.subr.mxu0 0.0
  %905 = vmatpush2.msra.mxu0 0.0
  %906 = vmatprep.subr.mxu0 0.0
  %907 = vmatpush2.msra.mxu0 0.0
  %908 = vmatprep.subr.mxu0 0.0
  %909 = vmatpush2.msra.mxu0 0.0
  %910 = vmatprep.subr.mxu0 0.0
  %911 = vmatpush2.msra.mxu0 0.0
  %912 = vmatprep.subr.mxu0 0.0
  %913 = vmatpush2.msra.mxu0 0.0
  %914 = vmatprep.subr.mxu0 0.0
  %915 = vmatpush2.msra.mxu0 0.0
  %916 = vmatprep.mubr.f32.mxu0 0.0
  %v917 = vand.u32 %v488, 4294901760
  %918 = vmatmul.mubr.f32.gmra.mxu0 %v917
  %v919 = vpop.f32.mrf.mxu0
  %v920 = vadd.f32 %v849, %v919
  %v921 = vpop.f32.mrf.mxu0
  %922 = vdwg.mxu0
  %v923 = vadd.f32 %v486, %v920
  %924 = vst.msk [vmem:[#allocation4] sm:$0xff] %vm483, %v923
  %v925 = vld [vmem:[#allocation5] sm:$0xff]
  %926 = vset.pattern.permute.xlu0 0
  %927 = vperm.xlu0 %926, %v26
  %v928 = vpop.permute.xlu0 %927
  %vm929 = vcmp.eq.s32.totalorder %v22, %v928
  %v930 = vsel %vm929, %v20, 0.0
  %v931 = vsel %vm28, %v930, 0.0
  %932 = vadd.xlane.f32.xlu0 %v931
  %v933 = vpop.xlane.xlu0 %932
  %v934 = vadd.f32 %v925, %v933
  %935 = vst.msk [vmem:[#allocation5] sm:$0xff] %vm483, %v934
  // Predicated region
  $region14: #{tpu_custom_call.1} parent=0 // pred_check
    %p936 = pneg %p11
  $region15: #{tpu_custom_call.1} parent=0 // pred_check_branch
    %938 = sbr.rel (%p936) target = $region17
  $region16: #{tpu_custom_call.1} parent=0 // pred_region
    %v939 = vld [vmem:[#allocation2] sm:$0xff]
    %v940 = vld [vmem:[#allocation3] sm:$0xff]
    %v941 = vlog2.pop %v940
    %v942 = vmul.f32 %v941, 0.6931472
    %v943 = vadd.f32 %v939, %v942
    %v944 = vld [vmem:[#allocation5] sm:$0xff]
    %v945 = vmul.f32 %v944, 0.9
    %v946 = vsub.f32 %v943, %v945
    %v947 = vld [vmem:[#allocation4] sm:$0xff]
    %v948 = vmul.f32 %v947, 0.00625
    %v949 = vsub.f32 %v946, %v948
    %950 = vst.msk [vmem:[%s2] sm:$0xff] %vm483, %v949
  $region17: #{tpu_custom_call.1} parent=0 // pred_fallthru
    _
  // Predicated region
  $region18: #{tpu_custom_call.1} parent=0 // pred_check
    _
  $region19: #{tpu_custom_call.1} parent=0 // pred_check_branch
    %952 = sbr.rel (0) target = $region21
  $region20: #{tpu_custom_call.1} parent=0 // pred_region
    _
  $region21: #{tpu_custom_call.1} parent=0 // pred_fallthru
    _
  // Predicated region
  $region22: #{tpu_custom_call.1} parent=0 // pred_check
    _
  $region23: #{tpu_custom_call.1} parent=0 // pred_check_branch
    %954 = sbr.rel (0) target = $region25
  $region24: #{tpu_custom_call.1} parent=0 // pred_region
    _
  $region25: #{tpu_custom_call.1} parent=0 // pred_fallthru
    _

</llo_original>
